<compile_context>
chip_gen: v7x
topology: tpu7x:2x2x1
jax: 0.10.0
libtpu: 0.0.40
codegen_flags: <defaults>
</compile_context>

<pallas_src>
import jax
import jax.numpy as jnp
from jax.experimental import pallas as pl
from jax.experimental.pallas import tpu as pltpu


# ~budget for the 2 inputs x 2 double-buffers worth of row tiles in VMEM.
_VMEM_INPUT_BUDGET_BYTES = 32 * 1024 * 1024
# Scoped VMEM limit: above the 16/32 MiB defaults, below v7x's 64 MiB physical.
_VMEM_LIMIT_BYTES = 48 * 1024 * 1024
_TILE_N_CAP = 1024  # >=512 rows is already ~85% of HBM roofline per tile sweeps


def _choose_tile_n(rows, n_classes, itemsize, budget_bytes=_VMEM_INPUT_BUDGET_BYTES):
    """Largest row tile (multiple of 8, <= cap) whose double-buffered inputs fit."""
    per_row_bytes = 4 * n_classes * itemsize  # 2 inputs x 2 buffers
    t = budget_bytes // max(per_row_bytes, 1)
    t = min(int(t), _TILE_N_CAP, int(rows))
    t = max(8, (t // 8) * 8)
    return int(t)


def _ce_soft_kernel(pred_ref, tgt_ref, out_ref, acc_ref):
    """One (tile_n, C) tile: stable log-sum-exp, fused soft-label CE, vector acc.

    grid = (row_groups [parallel], row_tiles_per_group [arbitrary, reduction]).
    """
    i = pl.program_id(1)

    @pl.when(i == 0)
    def _init():
        acc_ref[...] = jnp.zeros_like(acc_ref)

    p = pred_ref[...].astype(jnp.float32)  # (tile_n, C)
    t = tgt_ref[...].astype(jnp.float32)   # (tile_n, C)

    m = jnp.max(p, axis=-1, keepdims=True)                       # (tile_n, 1)
    z = p - m
    lse = jnp.log(jnp.sum(jnp.exp(z), axis=-1, keepdims=True))   # (tile_n, 1)

    # sum(-t * (z - lse), -1) == lse * sum(t, -1) - sum(t * z, -1)
    sum_t = jnp.sum(t, axis=-1, keepdims=True)                   # (tile_n, 1)
    sum_tz = jnp.sum(t * z, axis=-1, keepdims=True)              # (tile_n, 1)
    acc_ref[...] += lse * sum_t - sum_tz                         # VPU add only

    @pl.when(i == pl.num_programs(1) - 1)
    def _finalize():
        total = jnp.sum(acc_ref[...])                            # once per group
        out_ref[...] = jnp.full(out_ref.shape, total, out_ref.dtype)


def cross_entropy_soft_labels(predictions, soft_targets, *, tile_n=None,
                              num_row_groups=2):
    """predictions, soft_targets: (N, C) float (f32 or bf16). Returns f32 scalar."""
    N, C = predictions.shape
    assert soft_targets.shape == (N, C)

    itemsize = jnp.dtype(predictions.dtype).itemsize

    # Split rows across groups (one per TensorCore on v7x) only if there is
    # enough work; otherwise a single group.
    groups = num_row_groups if N >= 2 * 8 * num_row_groups else 1
    rows_per_group = pl.cdiv(N, groups)

    if tile_n is None:
        tile_n = _choose_tile_n(rows_per_group, C, itemsize)
    else:
        tile_n = max(8, (min(int(tile_n), int(rows_per_group)) // 8) * 8)

    tiles_per_group = pl.cdiv(rows_per_group, tile_n)
    n_pad = groups * tiles_per_group * tile_n

    if n_pad != N:
        pad = n_pad - N
        # Zero soft-target rows contribute exactly 0 to the summed loss.
        predictions = jnp.pad(predictions, ((0, pad), (0, 0)))
        soft_targets = jnp.pad(soft_targets, ((0, pad), (0, 0)))

    cost = pl.CostEstimate(
        flops=int(6 * n_pad * C),
        transcendentals=int(n_pad * C + n_pad),
        bytes_accessed=int(2 * n_pad * C * itemsize + groups * 128 * 4),
    )

    partials = pl.pallas_call(
        _ce_soft_kernel,
        out_shape=jax.ShapeDtypeStruct((groups, 128), jnp.float32),
        grid_spec=pltpu.PrefetchScalarGridSpec(
            num_scalar_prefetch=0,
            grid=(groups, tiles_per_group),
            in_specs=[
                pl.BlockSpec((tile_n, C),
                             lambda g, i, T=tiles_per_group: (g * T + i, 0)),
                pl.BlockSpec((tile_n, C),
                             lambda g, i, T=tiles_per_group: (g * T + i, 0)),
            ],
            out_specs=pl.BlockSpec((1, 128), lambda g, i: (g, 0)),
            scratch_shapes=[pltpu.VMEM((tile_n, 1), jnp.float32)],
        ),
        compiler_params=pltpu.CompilerParams(
            dimension_semantics=("parallel", "arbitrary"),
            vmem_limit_bytes=_VMEM_LIMIT_BYTES,
        ),
        cost_estimate=cost,
    )(predictions, soft_targets)

    # Combine per-group partial sums and take the mean over the *real* rows.
    return jnp.sum(partials[:, 0]) / jnp.float32(N)


def _reference(predictions, soft_targets):
    lsm = jax.nn.log_softmax(predictions.astype(jnp.float32), axis=-1)
    return jnp.mean(jnp.sum(-soft_targets.astype(jnp.float32) * lsm, axis=-1))


if __name__ == "__main__":
    key = jax.random.PRNGKey(0)

    # Test 1: small (batch, classes) shape, single group / single tile.
    k1, k2, k3, k4 = jax.random.split(key, 4)
    N1, C1 = 16, 32
    pred1 = jax.random.normal(k1, (N1, C1), dtype=jnp.float32)
    tgt1 = jax.nn.softmax(jax.random.normal(k2, (N1, C1), dtype=jnp.float32), axis=-1)

    loss1 = jax.block_until_ready(cross_entropy_soft_labels(pred1, tgt1))
    ref1 = _reference(pred1, tgt1)
    assert jnp.allclose(loss1, ref1, rtol=1e-5, atol=1e-5), (loss1, ref1)

    # Test 2: N not a multiple of the tile -> exercises row padding, two row
    # groups (parallel axis) and multiple reduction tiles per group.
    N2, C2 = 45, 32
    pred2 = jax.random.normal(k3, (N2, C2), dtype=jnp.float32)
    tgt2 = jax.nn.softmax(jax.random.normal(k4, (N2, C2), dtype=jnp.float32), axis=-1)

    loss2 = jax.block_until_ready(cross_entropy_soft_labels(pred2, tgt2, tile_n=16))
    ref2 = _reference(pred2, tgt2)
    assert jnp.allclose(loss2, ref2, rtol=1e-5, atol=1e-5), (loss2, ref2)

    print("KERNEL_OK")
</pallas_src>

<mosaic_0001>
module attributes {stable_mosaic.version = 11 : i64} {
  func.func @_ce_soft_kernel(%arg0: i32, %arg1: i32, %arg2: memref<16x32xf32, #tpu.memory_space<vmem>>, %arg3: memref<16x32xf32, #tpu.memory_space<vmem>>, %arg4: memref<1x128xf32, #tpu.memory_space<vmem>>, %arg5: memref<16x1xf32, #tpu.memory_space<vmem>>) attributes {dimension_semantics = [#tpu.dimension_semantics<parallel>, #tpu.dimension_semantics<arbitrary>], iteration_bounds = array<i64: 1, 1>, scalar_prefetch = 0 : i64, scratch_operands = 1 : i64, tpu.core_type = #tpu.core_type<tc>, window_params = [{transform_indices = @transform_0, window_bounds = array<i64: 16, 32>}, {transform_indices = @transform_1, window_bounds = array<i64: 16, 32>}, {transform_indices = @transform_2, window_bounds = array<i64: 1, 128>}]} {
    %c0_i32 = arith.constant 0 : i32
    %0 = arith.cmpi eq, %arg1, %c0_i32 : i32
    %1 = arith.extui %0 : i1 to i32
    %c0_i32_0 = arith.constant 0 : i32
    %2 = arith.cmpi ne, %1, %c0_i32_0 : i32
    scf.if %2 {
      %cst_13 = arith.constant 0.000000e+00 : f32
      %26 = vector.broadcast %cst_13 : f32 to vector<16x1xf32>
      %c0_14 = arith.constant 0 : index
      %c0_15 = arith.constant 0 : index
      %27 = vector.load %arg5[%c0_14, %c0_15] : memref<16x1xf32, #tpu.memory_space<vmem>>, vector<16x1xf32>
      tpu.vector_store %arg5[%c0_14, %c0_15], %26 {strides = array<i32>} : memref<16x1xf32, #tpu.memory_space<vmem>>, vector<16x1xf32>,
    } else {
    }
    %c0 = arith.constant 0 : index
    %c0_1 = arith.constant 0 : index
    %3 = vector.load %arg2[%c0, %c0_1] : memref<16x32xf32, #tpu.memory_space<vmem>>, vector<16x32xf32>
    %c0_2 = arith.constant 0 : index
    %c0_3 = arith.constant 0 : index
    %4 = vector.load %arg3[%c0_2, %c0_3] : memref<16x32xf32, #tpu.memory_space<vmem>>, vector<16x32xf32>
    %cst = arith.constant dense<0xFF800000> : vector<16xf32>
    %5 = vector.multi_reduction <maximumf>, %3, %cst [1] : vector<16x32xf32> to vector<16xf32>
    %6 = vector.shape_cast %5 : vector<16xf32> to vector<16x1xf32>
    %7 = vector.broadcast %6 : vector<16x1xf32> to vector<16x32xf32>
    %8 = arith.subf %3, %7 : vector<16x32xf32>
    %9 = math.exp %8 : vector<16x32xf32>
    %cst_4 = arith.constant dense<0.000000e+00> : vector<16xf32>
    %10 = vector.multi_reduction <add>, %9, %cst_4 [1] : vector<16x32xf32> to vector<16xf32>
    %11 = vector.shape_cast %10 : vector<16xf32> to vector<16x1xf32>
    %12 = math.log %11 : vector<16x1xf32>
    %cst_5 = arith.constant dense<0.000000e+00> : vector<16xf32>
    %13 = vector.multi_reduction <add>, %4, %cst_5 [1] : vector<16x32xf32> to vector<16xf32>
    %14 = vector.shape_cast %13 : vector<16xf32> to vector<16x1xf32>
    %15 = arith.mulf %4, %8 : vector<16x32xf32>
    %cst_6 = arith.constant dense<0.000000e+00> : vector<16xf32>
    %16 = vector.multi_reduction <add>, %15, %cst_6 [1] : vector<16x32xf32> to vector<16xf32>
    %17 = vector.shape_cast %16 : vector<16xf32> to vector<16x1xf32>
    %c0_7 = arith.constant 0 : index
    %c0_8 = arith.constant 0 : index
    %18 = vector.load %arg5[%c0_7, %c0_8] : memref<16x1xf32, #tpu.memory_space<vmem>>, vector<16x1xf32>
    %19 = arith.mulf %12, %14 : vector<16x1xf32>
    %20 = arith.subf %19, %17 : vector<16x1xf32>
    %21 = arith.addf %18, %20 : vector<16x1xf32>
    %c0_9 = arith.constant 0 : index
    %c0_10 = arith.constant 0 : index
    %22 = vector.load %arg5[%c0_9, %c0_10] : memref<16x1xf32, #tpu.memory_space<vmem>>, vector<16x1xf32>
    tpu.vector_store %arg5[%c0_9, %c0_10], %21 {strides = array<i32>} : memref<16x1xf32, #tpu.memory_space<vmem>>, vector<16x1xf32>,
    %c0_i32_11 = arith.constant 0 : i32
    %23 = arith.cmpi eq, %arg1, %c0_i32_11 : i32
    %24 = arith.extui %23 : i1 to i32
    %c0_i32_12 = arith.constant 0 : i32
    %25 = arith.cmpi ne, %24, %c0_i32_12 : i32
    scf.if %25 {
      %c0_13 = arith.constant 0 : index
      %c0_14 = arith.constant 0 : index
      %26 = vector.load %arg5[%c0_13, %c0_14] : memref<16x1xf32, #tpu.memory_space<vmem>>, vector<16x1xf32>
      %27 = vector.shape_cast %26 : vector<16x1xf32> to vector<1x16x1xf32>
      %cst_15 = arith.constant dense<0.000000e+00> : vector<1xf32>
      %28 = vector.multi_reduction <add>, %27, %cst_15 [1, 2] : vector<1x16x1xf32> to vector<1xf32>
      %29 = vector.shape_cast %28 : vector<1xf32> to vector<1x1x1xf32>
      %30 = vector.extract %29[0, 0, 0] : f32 from vector<1x1x1xf32>
      %31 = vector.broadcast %30 : f32 to vector<1x128xf32>
      %c0_16 = arith.constant 0 : index
      %c0_17 = arith.constant 0 : index
      %32 = vector.load %arg4[%c0_16, %c0_17] : memref<1x128xf32, #tpu.memory_space<vmem>>, vector<1x128xf32>
      tpu.vector_store %arg4[%c0_16, %c0_17], %31 {strides = array<i32>} : memref<1x128xf32, #tpu.memory_space<vmem>>, vector<1x128xf32>,
    } else {
    }
    return
  }
  func.func @transform_0(%arg0: i32, %arg1: i32) -> (i32, i32) {
    %c1_i32 = arith.constant 1 : i32
    %0 = arith.muli %arg0, %c1_i32 : i32
    %1 = arith.addi %0, %arg1 : i32
    %c0_i32 = arith.constant 0 : i32
    %c0_i32_0 = arith.constant 0 : i32
    return %1, %c0_i32 : i32, i32
  }
  func.func @transform_1(%arg0: i32, %arg1: i32) -> (i32, i32) {
    %c1_i32 = arith.constant 1 : i32
    %0 = arith.muli %arg0, %c1_i32 : i32
    %1 = arith.addi %0, %arg1 : i32
    %c0_i32 = arith.constant 0 : i32
    %c0_i32_0 = arith.constant 0 : i32
    return %1, %c0_i32 : i32, i32
  }
  func.func @transform_2(%arg0: i32, %arg1: i32) -> (i32, i32) {
    %c0_i32 = arith.constant 0 : i32
    %c0_i32_0 = arith.constant 0 : i32
    return %arg0, %c0_i32 : i32, i32
  }
}

</mosaic_0001>

<llo_original>
// kernel: tpu_custom_call.1
$region0: #{tpu_custom_call.1}
  #allocation0 [shape = 'u32[]', space=smem, size = 0x4, offset = 0x4, fixed_abs, tag = 'smem constant byte address 0x4 - core index']
  #allocation1 [shape = 'u32[144,128]{1,0:T(1,128)}', space=vmem, size = 0x12000, scoped, tag = 'internal scratch']
  #allocation2 [shape = 'f32[16,1]{1,0:T(8,128)}', space=vmem, size = 0x2000, scoped, tag = 'scratch operand']
  %s0 = inlined_call_operand.hbm [shape: f32[16,32], index: 0, kind: input, shape index: {}]
  %s1 = inlined_call_operand.hbm [shape: f32[16,32], index: 1, kind: input, shape index: {}]
  %s2 = inlined_call_operand.hbm [shape: f32[1,128], index: 2, kind: output, shape index: {}]
  %s3 = sld [smem:[#allocation0]]
  $region34: #{tpu_custom_call.1} parent=0
    _
  %s5 = ssub.s32 1, %s3
  %s6 = scalar_select 0, %s5, %s3
  $region1: #{tpu_custom_call.1} parent=0
    #allocation3 [shape = 'u8[8192]{0}', space=vmem, size = 0x2000, scoped, tag = 'input window, operand 0, single buffered']
    #allocation4 [shape = 's32[1]{0}', space=sflag, size = 0x4, scoped, tag = 'scoped memory for tpu_custom_call.1']
    #allocation5 [shape = 's32[1]{0}', space=sflag, size = 0x4, scoped, tag = 'scoped memory for tpu_custom_call.1']
    #allocation6 [shape = 'u8[8192]{0}', space=vmem, size = 0x2000, scoped, tag = 'input window, operand 1, single buffered']
    #allocation7 [shape = 's32[1]{0}', space=sflag, size = 0x4, scoped, tag = 'scoped memory for tpu_custom_call.1']
    #allocation8 [shape = 'u8[512]{0}', space=vmem, size = 0x400, scoped, tag = 'output window, operand 0, single buffered']
    %7 = vsyncpa [#allocation4], 0
    %8 = vsyncpa [#allocation7], 0
    %9 = vsyncpa [#allocation5], 0
    // Predicated region
    $region2: #{tpu_custom_call.1} parent=1 // pred_check
      _
    $region3: #{tpu_custom_call.1} parent=1 // pred_check_branch
      %11 = sbr.rel (0) target = $region5
    $region4: #{tpu_custom_call.1} parent=1 // pred_region
      %s12 = sadd.s32 0, 0
      %s13 = smul.u32 2, %s12
      %s15 = ssub.s32 256, 256
      %16 = vsyncadd [#allocation4], %s15
      %s17 = smul.addr %s13, 128
      %s18 = scalar_lea.hbm %s0, %s17
      %s19 = sshll.u32 [#allocation3], 4
      %s20 = int_to_ptr.vmem [resolvable:$true] %s19
      %25 = dma.hbm_to_vmem [thread:$0]  %s18, 256, %s20, [#allocation4], 128, 128, 8
    $region5: #{tpu_custom_call.1} parent=1 // pred_fallthru
      _
    // Predicated region
    $region6: #{tpu_custom_call.1} parent=1 // pred_check
      _
    $region7: #{tpu_custom_call.1} parent=1 // pred_check_branch
      %27 = sbr.rel (0) target = $region9
    $region8: #{tpu_custom_call.1} parent=1 // pred_region
      %s28 = sadd.s32 0, 0
      %s29 = smul.u32 2, %s28
      %s31 = ssub.s32 256, 256
      %32 = vsyncadd [#allocation7], %s31
      %s33 = smul.addr %s29, 128
      %s34 = scalar_lea.hbm %s1, %s33
      %s35 = sshll.u32 [#allocation6], 4
      %s36 = int_to_ptr.vmem [resolvable:$true] %s35
      %41 = dma.hbm_to_vmem [thread:$0]  %s34, 256, %s36, [#allocation7], 128, 128, 8
    $region9: #{tpu_custom_call.1} parent=1 // pred_fallthru
      _
    // Predicated region
    $region10: #{tpu_custom_call.1} parent=1 // pred_check
      _
    $region11: #{tpu_custom_call.1} parent=1 // pred_check_branch
      %43 = sbr.rel (0) target = $region13
    $region12: #{tpu_custom_call.1} parent=1 // pred_region
      %44 = dma.done [#allocation4], 256
    $region13: #{tpu_custom_call.1} parent=1 // pred_fallthru
      _
    // Predicated region
    $region14: #{tpu_custom_call.1} parent=1 // pred_check
      _
    $region15: #{tpu_custom_call.1} parent=1 // pred_check_branch
      %46 = sbr.rel (0) target = $region17
    $region16: #{tpu_custom_call.1} parent=1 // pred_region
      %47 = dma.done [#allocation7], 256
    $region17: #{tpu_custom_call.1} parent=1 // pred_fallthru
      _
    %s48 = sadd.s32 0, 0
    %s49 = smul.u32 2, %s48
    %s50 = sadd.s32 0, 0
    %s51 = smul.u32 2, %s50
    %p52 = scmp.eq.s32.totalorder 0, 0
    // Predicated region
    $region18: #{tpu_custom_call.1} parent=1 // pred_check
      %p53 = pneg %p52
    $region19: #{tpu_custom_call.1} parent=1 // pred_check_branch
      %55 = sbr.rel (%p53) target = $region21
    $region20: #{tpu_custom_call.1} parent=1 // pred_region
      %vm56 = vcmask 7168
      %57 = vst.msk [vmem:[#allocation2] sm:$0xff] %vm56, 0.0
      %58 = vst.msk [vmem:[#allocation2 + $0x8] sm:$0xff] %vm56, 0.0
    $region21: #{tpu_custom_call.1} parent=1 // pred_fallthru
      _
    %v59 = vld [vmem:[#allocation3] sm:$0xff]
    %v60 = vld [vmem:[#allocation3 + $0x8] sm:$0xff]
    %v61 = vld [vmem:[#allocation6] sm:$0xff]
    %v62 = vld [vmem:[#allocation6 + $0x8] sm:$0xff]
    %vm63 = vcmask 261120
    %v64 = vsel %vm63, %v59, -inf
    %65 = vmax.xlane.f32.xlu0 %v64
    %v66 = vpop.xlane.xlu0 %65
    %v67 = vsel %vm63, %v60, -inf
    %68 = vmax.xlane.f32.xlu0 %v67
    %v69 = vpop.xlane.xlu0 %68
    %v70 = vsub.f32 %v59, %v66
    %v71 = vsub.f32 %v60, %v69
    %v72 = vmul.f32 %v70, 1.442695
    %v73 = vpow.pop %v72
    %v74 = vmul.f32 %v71, 1.442695
    %v75 = vpow.pop %v74
    %v76 = vsel %vm63, %v73, 0.0
    %77 = vadd.xlane.f32.xlu0 %v76
    %v78 = vpop.xlane.xlu0 %77
    %v79 = vsel %vm63, %v75, 0.0
    %80 = vadd.xlane.f32.xlu0 %v79
    %v81 = vpop.xlane.xlu0 %80
    %v82 = vlog2.pop %v78
    %v83 = vmul.f32 %v82, 0.6931472
    %v84 = vlog2.pop %v81
    %v85 = vmul.f32 %v84, 0.6931472
    %v86 = vsel %vm63, %v61, 0.0
    %87 = vadd.xlane.f32.xlu0 %v86
    %v88 = vpop.xlane.xlu0 %87
    %v89 = vsel %vm63, %v62, 0.0
    %90 = vadd.xlane.f32.xlu0 %v89
    %v91 = vpop.xlane.xlu0 %90
    %v92 = vmul.f32 %v61, %v70
    %v93 = vmul.f32 %v62, %v71
    %v94 = vsel %vm63, %v92, 0.0
    %95 = vadd.xlane.f32.xlu0 %v94
    %v96 = vpop.xlane.xlu0 %95
    %v97 = vsel %vm63, %v93, 0.0
    %98 = vadd.xlane.f32.xlu0 %v97
    %v99 = vpop.xlane.xlu0 %98
    %v100 = vld [vmem:[#allocation2] sm:$0xff]
    %v101 = vld [vmem:[#allocation2 + $0x8] sm:$0xff]
    %v102 = vmul.f32 %v83, %v88
    %v103 = vmul.f32 %v85, %v91
    %v104 = vsub.f32 %v102, %v96
    %v105 = vsub.f32 %v103, %v99
    %v106 = vadd.f32 %v100, %v104
    %v107 = vadd.f32 %v101, %v105
    %vm108 = vcmask 7168
    %109 = vst.msk [vmem:[#allocation2] sm:$0xff] %vm108, %v106
    %110 = vst.msk [vmem:[#allocation2 + $0x8] sm:$0xff] %vm108, %v107
    // Predicated region
    $region22: #{tpu_custom_call.1} parent=1 // pred_check
      %p111 = pneg %p52
    $region23: #{tpu_custom_call.1} parent=1 // pred_check_branch
      %113 = sbr.rel (%p111) target = $region25
    $region24: #{tpu_custom_call.1} parent=1 // pred_region
      %v114 = vld [vmem:[#allocation2] sm:$0xff]
      %v115 = vld [vmem:[#allocation2 + $0x8] sm:$0xff]
      %v116 = vsel %vm108, %v114, 0.0
      %v117 = vsel %vm108, %v115, 0.0
      %v118 = vadd.f32 %v116, %v117
      %119 = vadd.xlane.f32.xlu0 %v118
      %v120 = vpop.xlane.xlu0 %119
      %v121 = vrot.slane %v120, 4
      %v122 = vadd.f32 %v120, %v121
      %v123 = vrot.slane %v122, 2
      %v124 = vadd.f32 %v122, %v123
      %v125 = vrot.slane %v124, 1
      %v126 = vadd.f32 %v124, %v125
      %s127 = vtos %v126
      %v128 = vstv %s127
      %129 = vst [vmem:[#allocation8] sm:$0x1] %v128
    $region25: #{tpu_custom_call.1} parent=1 // pred_fallthru
      _
    // Predicated region
    $region26: #{tpu_custom_call.1} parent=1 // pred_check
      _
    $region27: #{tpu_custom_call.1} parent=1 // pred_check_branch
      %131 = sbr.rel (0) target = $region29
    $region28: #{tpu_custom_call.1} parent=1 // pred_region
      %s133 = ssub.s32 16, 16
      %134 = vsyncadd [#allocation5], %s133
      %s136 = sshll.u32 [#allocation8], 4
      %s137 = int_to_ptr.vmem [resolvable:$true] %s136
      %139 = dma.vmem_to_hbm [thread:$0]  %s137, 16, %s2, [#allocation5]
    $region29: #{tpu_custom_call.1} parent=1 // pred_fallthru
      _
    // Predicated region
    $region30: #{tpu_custom_call.1} parent=1 // pred_check
      _
    $region31: #{tpu_custom_call.1} parent=1 // pred_check_branch
      %141 = sbr.rel (0) target = $region33
    $region32: #{tpu_custom_call.1} parent=1 // pred_region
      %142 = dma.done [#allocation5], 16
    $region33: #{tpu_custom_call.1} parent=1 // pred_fallthru
      _
    %143 = vsyncpa [#allocation4], 1
    %144 = vsyncpa [#allocation7], 1
    %145 = vsyncpa [#allocation5], 1

</llo_original>
